<compile_context>
chip_gen: v5e
topology: v5e:2x2
jax: 0.10.0
libtpu: 0.0.40
codegen_flags: <defaults>
</compile_context>

<pallas_src>
import functools

import jax
import jax.numpy as jnp
from jax import lax
from jax.experimental import pallas as pl
from jax.experimental.pallas import tpu as pltpu

EPS = 1e-6  # same eps F.pairwise_distance adds to (x1 - x2)

_SINGLE_TILE_BYTES = 1 << 20      # below this total input size: skip the grid
_TARGET_TILE_BYTES = 512 * 1024   # per-input tile; 2 inputs x 2 buffers = 2 MiB
                                  # of pipelined VMEM, safe on v5e/v6e/v7x with
                                  # room left for f32 intermediates.


def _round_up(x, m):
    return (x + m - 1) // m * m


def _per_sample_loss(o1, o2, lbl, margin):
    """Shared math on one (rows, D) block; returns (rows, 1) f32 losses."""
    diff = o1 - o2 + EPS                                      # (rows, D) f32
    sq_sum = jnp.sum(diff * diff, axis=-1, keepdims=True)     # (rows, 1)
    dist = jnp.sqrt(sq_sum)                                   # EUP slot
    hinge = jnp.maximum(margin - dist, 0.0)
    # use sq_sum directly for the "similar" term (saves a square, more exact)
    return (1.0 - lbl) * sq_sum + lbl * (hinge * hinge)


def _single_tile_kernel(o1_ref, o2_ref, lbl_ref, out_ref, *, margin):
    o1 = o1_ref[...].astype(jnp.float32)
    o2 = o2_ref[...].astype(jnp.float32)
    lbl = lbl_ref[...].astype(jnp.float32)
    per_sample = _per_sample_loss(o1, o2, lbl, margin)        # (B, 1)
    out_ref[...] = jnp.mean(per_sample, keepdims=True)        # (1, 1)


def _tiled_kernel(o1_ref, o2_ref, lbl_ref, out_ref, acc_ref, *,
                  margin, true_b, tile_b):
    pid = pl.program_id(0)

    @pl.when(pid == 0)
    def _():
        acc_ref[...] = jnp.zeros_like(acc_ref)

    # cast the native-dtype (e.g. bf16) DMA'd tile to f32 in-kernel
    o1 = o1_ref[...].astype(jnp.float32)
    o2 = o2_ref[...].astype(jnp.float32)
    lbl = lbl_ref[...].astype(jnp.float32)
    per_sample = _per_sample_loss(o1, o2, lbl, margin)        # (tile_b, 1)

    # zero out rows that belong to batch padding (partial last tile)
    rows = pid * tile_b + lax.broadcasted_iota(jnp.int32, per_sample.shape, 0)
    per_sample = jnp.where(rows < true_b, per_sample, 0.0)

    acc_ref[...] += jnp.sum(per_sample, keepdims=True)        # (1, 1) running sum

    @pl.when(pid == pl.num_programs(0) - 1)
    def _():
        out_ref[...] = acc_ref[...] * (1.0 / true_b)          # true mean over B


def contrastive_loss(output1, output2, label, margin=4.0):
    B, D = output1.shape
    lbl = jnp.asarray(label, jnp.float32).reshape(B, 1)
    itemsize = jnp.dtype(output1.dtype).itemsize
    total_bytes = 2 * B * D * itemsize

    cost = pl.CostEstimate(
        flops=6 * B * D,
        transcendentals=B,
        bytes_accessed=total_bytes + B * 4 + 4,
    )

    # ---- tiny-input fast path: one VMEM-resident tile, no grid --------------
    if total_bytes <= _SINGLE_TILE_BYTES:
        kernel = functools.partial(_single_tile_kernel, margin=float(margin))
        out = pl.pallas_call(
            kernel,
            out_shape=jax.ShapeDtypeStruct((1, 1), jnp.float32),
            in_specs=[
                pl.BlockSpec((B, D), lambda: (0, 0)),
                pl.BlockSpec((B, D), lambda: (0, 0)),
                pl.BlockSpec((B, 1), lambda: (0, 0)),
            ],
            out_specs=pl.BlockSpec((1, 1), lambda: (0, 0)),
            cost_estimate=cost,
        )(output1, output2, lbl)
        return out[0, 0]

    # ---- gridded, double-buffered path over the batch -----------------------
    row_bytes = D * itemsize
    tile_b = max(8, (_TARGET_TILE_BYTES // row_bytes) // 8 * 8)
    tile_b = min(tile_b, _round_up(B, 8))
    b_pad = _round_up(B, tile_b)
    num_tiles = b_pad // tile_b

    o1, o2 = output1, output2
    if b_pad != B:
        pad = b_pad - B
        o1 = jnp.pad(o1, ((0, pad), (0, 0)))
        o2 = jnp.pad(o2, ((0, pad), (0, 0)))
        lbl = jnp.pad(lbl, ((0, pad), (0, 0)))

    kernel = functools.partial(
        _tiled_kernel, margin=float(margin), true_b=int(B), tile_b=int(tile_b))

    out = pl.pallas_call(
        kernel,
        out_shape=jax.ShapeDtypeStruct((1, 1), jnp.float32),
        grid_spec=pltpu.PrefetchScalarGridSpec(
            num_scalar_prefetch=0,
            grid=(num_tiles,),
            in_specs=[
                pl.BlockSpec((tile_b, D), lambda i: (i, 0)),
                pl.BlockSpec((tile_b, D), lambda i: (i, 0)),
                pl.BlockSpec((tile_b, 1), lambda i: (i, 0)),
            ],
            out_specs=pl.BlockSpec((1, 1), lambda i: (0, 0)),
            scratch_shapes=[pltpu.VMEM((1, 1), jnp.float32)],
        ),
        compiler_params=pltpu.CompilerParams(
            dimension_semantics=("arbitrary",),   # serial accumulator over batch tiles
        ),
        cost_estimate=cost,
    )(o1, o2, lbl)
    return out[0, 0]


def _reference(output1, output2, label, margin=4.0):
    # pure-JAX reference mirroring the PyTorch forward (f32 math)
    o1 = output1.astype(jnp.float32)
    o2 = output2.astype(jnp.float32)
    lbl = label.astype(jnp.float32)
    diff = o1 - o2 + EPS
    dist = jnp.sqrt(jnp.sum(diff * diff, axis=-1))
    hinge = jnp.maximum(margin - dist, 0.0)
    return jnp.mean((1.0 - lbl) * dist ** 2 + lbl * hinge ** 2)


if __name__ == "__main__":
    key = jax.random.PRNGKey(0)
    k1, k2, k3, k4, k5, k6 = jax.random.split(key, 6)

    # small shape -> single-tile fast path
    B, D = 8, 32
    o1 = jax.random.normal(k1, (B, D), dtype=jnp.float32)
    o2 = jax.random.normal(k2, (B, D), dtype=jnp.float32)
    lbl = jax.random.bernoulli(k3, 0.5, (B,)).astype(jnp.float32)

    loss = contrastive_loss(o1, o2, lbl)
    jax.block_until_ready(loss)
    ref = _reference(o1, o2, lbl)
    assert jnp.allclose(loss, ref, rtol=1e-5, atol=1e-5), (loss, ref)

    # larger bf16 shape -> gridded/pipelined path (native-dtype DMA,
    # multi-tile grid with a masked partial last tile)
    B2, D2 = 3000, 384
    o1b = jax.random.normal(k4, (B2, D2), dtype=jnp.float32).astype(jnp.bfloat16)
    o2b = jax.random.normal(k5, (B2, D2), dtype=jnp.float32).astype(jnp.bfloat16)
    lblb = jax.random.bernoulli(k6, 0.5, (B2,)).astype(jnp.float32)

    loss2 = contrastive_loss(o1b, o2b, lblb)
    jax.block_until_ready(loss2)
    ref2 = _reference(o1b, o2b, lblb)
    assert jnp.allclose(loss2, ref2, rtol=1e-3, atol=1e-3), (loss2, ref2)

    print("KERNEL_OK")
</pallas_src>

<mosaic_0001>
module attributes {stable_mosaic.version = 11 : i64} {
  func.func @_single_tile_kernel(%arg0: memref<8x32xf32, #tpu.memory_space<vmem>>, %arg1: memref<8x32xf32, #tpu.memory_space<vmem>>, %arg2: memref<8x1xf32, #tpu.memory_space<vmem>>, %arg3: memref<1x1xf32, #tpu.memory_space<vmem>>) attributes {dimension_semantics = [], scalar_prefetch = 0 : i64, scratch_operands = 0 : i64, tpu.core_type = #tpu.core_type<tc>} {
    %c0 = arith.constant 0 : index
    %c0_0 = arith.constant 0 : index
    %0 = vector.load %arg0[%c0, %c0_0] : memref<8x32xf32, #tpu.memory_space<vmem>>, vector<8x32xf32>
    %c0_1 = arith.constant 0 : index
    %c0_2 = arith.constant 0 : index
    %1 = vector.load %arg1[%c0_1, %c0_2] : memref<8x32xf32, #tpu.memory_space<vmem>>, vector<8x32xf32>
    %c0_3 = arith.constant 0 : index
    %c0_4 = arith.constant 0 : index
    %2 = vector.load %arg2[%c0_3, %c0_4] : memref<8x1xf32, #tpu.memory_space<vmem>>, vector<8x1xf32>
    %3 = arith.subf %0, %1 : vector<8x32xf32>
    %cst = arith.constant 9.99999997E-7 : f32
    %4 = vector.broadcast %cst : f32 to vector<8x32xf32>
    %5 = arith.addf %3, %4 : vector<8x32xf32>
    %6 = arith.mulf %5, %5 : vector<8x32xf32>
    %cst_5 = arith.constant dense<0.000000e+00> : vector<8xf32>
    %7 = vector.multi_reduction <add>, %6, %cst_5 [1] : vector<8x32xf32> to vector<8xf32>
    %8 = vector.shape_cast %7 : vector<8xf32> to vector<8x1xf32>
    %9 = math.sqrt %8 : vector<8x1xf32>
    %cst_6 = arith.constant 4.000000e+00 : f32
    %10 = vector.broadcast %cst_6 : f32 to vector<8x1xf32>
    %11 = arith.subf %10, %9 : vector<8x1xf32>
    %cst_7 = arith.constant 0.000000e+00 : f32
    %12 = vector.broadcast %cst_7 : f32 to vector<8x1xf32>
    %13 = arith.maximumf %11, %12 : vector<8x1xf32>
    %cst_8 = arith.constant 1.000000e+00 : f32
    %14 = vector.broadcast %cst_8 : f32 to vector<8x1xf32>
    %15 = arith.subf %14, %2 : vector<8x1xf32>
    %16 = arith.mulf %15, %8 : vector<8x1xf32>
    %17 = arith.mulf %13, %13 : vector<8x1xf32>
    %18 = arith.mulf %2, %17 : vector<8x1xf32>
    %19 = arith.addf %16, %18 : vector<8x1xf32>
    %20 = vector.shape_cast %19 : vector<8x1xf32> to vector<1x8x1xf32>
    %cst_9 = arith.constant dense<0.000000e+00> : vector<1xf32>
    %21 = vector.multi_reduction <add>, %20, %cst_9 [1, 2] : vector<1x8x1xf32> to vector<1xf32>
    %22 = vector.shape_cast %21 : vector<1xf32> to vector<1x1x1xf32>
    %23 = vector.extract %22[0, 0, 0] : f32 from vector<1x1x1xf32>
    %24 = vector.broadcast %23 : f32 to vector<1x1xf32>
    %cst_10 = arith.constant 8.000000e+00 : f32
    %25 = vector.broadcast %cst_10 : f32 to vector<1x1xf32>
    %26 = arith.divf %24, %25 : vector<1x1xf32>
    %c0_11 = arith.constant 0 : index
    %c0_12 = arith.constant 0 : index
    %27 = vector.load %arg3[%c0_11, %c0_12] : memref<1x1xf32, #tpu.memory_space<vmem>>, vector<1x1xf32>
    tpu.vector_store %arg3[%c0_11, %c0_12], %26 {strides = array<i32>} : memref<1x1xf32, #tpu.memory_space<vmem>>, vector<1x1xf32>,
    return
  }
}

</mosaic_0001>

<llo_original>
// kernel: tpu_custom_call.1
$region0: #{tpu_custom_call.1}
  #allocation0 [shape = 'u32[]', space=smem, size = 0x4, offset = 0x4, fixed_abs, tag = 'smem constant byte address 0x4 - core index']
  #allocation1 [shape = 'u32[72,128]{1,0:T(1,128)}', space=vmem, size = 0x9000, scoped, tag = 'internal scratch']
  %s0 = inlined_call_operand.vmem [shape: f32[8,32], index: 0, kind: input, shape index: {}]
  %s1 = inlined_call_operand.hbm [shape: f32[8,32], index: 1, kind: input, shape index: {}]
  %s2 = inlined_call_operand.vmem [shape: f32[8,1], index: 2, kind: input, shape index: {}]
  %s3 = inlined_call_operand.hbm [shape: f32[1,1], index: 3, kind: output, shape index: {}]
  %s4 = sld [smem:[#allocation0]]
  $region26: #{tpu_custom_call.1} parent=0
    _
  %s6 = ssub.s32 1, %s4
  %s7 = scalar_select 0, %s6, %s4
  $region1: #{tpu_custom_call.1} parent=0
    #allocation2 [shape = 'u8[4096]{0}', space=vmem, size = 0x1000, scoped, tag = 'input window, operand 1, single buffered']
    #allocation3 [shape = 's32[1]{0}', space=sflag, size = 0x4, scoped, tag = 'scoped memory for tpu_custom_call.1']
    #allocation4 [shape = 's32[1]{0}', space=sflag, size = 0x4, scoped, tag = 'scoped memory for tpu_custom_call.1']
    #allocation5 [shape = 'u8[512]{0}', space=vmem, size = 0x400, scoped, tag = 'output window, operand 0, single buffered']
    %8 = vsyncpa [#allocation3], 0
    %9 = vsyncpa [#allocation4], 0
    // Predicated region
    $region2: #{tpu_custom_call.1} parent=1 // pred_check
      _
    $region3: #{tpu_custom_call.1} parent=1 // pred_check_branch
      %11 = sbr.rel (0) target = $region5
    $region4: #{tpu_custom_call.1} parent=1 // pred_region
      _
    $region5: #{tpu_custom_call.1} parent=1 // pred_fallthru
      _
    // Predicated region
    $region6: #{tpu_custom_call.1} parent=1 // pred_check
      _
    $region7: #{tpu_custom_call.1} parent=1 // pred_check_branch
      %13 = sbr.rel (0) target = $region9
    $region8: #{tpu_custom_call.1} parent=1 // pred_region
      %15 = vsyncadd [#allocation3], 0
      %s17 = sshll.u32 %s1, 4
      %s18 = int_to_ptr.hbm [resolvable:$true] %s17
      %s19 = sshll.u32 [#allocation2], 4
      %s20 = int_to_ptr.vmem [resolvable:$true] %s19
      %22 = dma.hbm_to_vmem [thread:$0]  %s18, 128, %s20, [#allocation3]
    $region9: #{tpu_custom_call.1} parent=1 // pred_fallthru
      _
    // Predicated region
    $region10: #{tpu_custom_call.1} parent=1 // pred_check
      _
    $region11: #{tpu_custom_call.1} parent=1 // pred_check_branch
      %24 = sbr.rel (0) target = $region13
    $region12: #{tpu_custom_call.1} parent=1 // pred_region
      _
    $region13: #{tpu_custom_call.1} parent=1 // pred_fallthru
      _
    // Predicated region
    $region14: #{tpu_custom_call.1} parent=1 // pred_check
      _
    $region15: #{tpu_custom_call.1} parent=1 // pred_check_branch
      %26 = sbr.rel (0) target = $region17
    $region16: #{tpu_custom_call.1} parent=1 // pred_region
      %28 = dma.done [#allocation3], 128
    $region17: #{tpu_custom_call.1} parent=1 // pred_fallthru
      _
    %v29 = vld [vmem:[%s0] sm:$0xff]
    %v30 = vld [vmem:[#allocation2] sm:$0xff]
    %v31 = vld [vmem:[%s2] sm:$0xff]
    %v32 = vsub.f32 %v29, %v30
    %v33 = vadd.f32 %v32, 1e-06
    %v34 = vmul.f32 %v33, %v33
    %vm35 = vcmask 261120
    %v36 = vsel %vm35, %v34, 0.0
    %37 = vadd.xlane.f32.xlu0 %v36
    %v38 = vpop.xlane.xlu0 %37
    %v39 = vrsqrt.pop %v38
    %v40 = vmul.f32 %v39, %v38
    %v41 = vmul.f32 %v40, %v39
    %v42 = vmul.f32 0.5, %v41
    %v43 = vsub.f32 1.5, %v42
    %v44 = vmul.f32 %v39, %v43
    %v45 = vmul.f32 %v38, %v44
    %vm46 = vcmp.eq.f32.partialorder %v38, inf
    %v47 = vsel %vm46, %v38, %v45
    %vm48 = vcmp.eq.f32.partialorder %v38, 0.0
    %v49 = vand.u32 %v38, 2147483648
    %v50 = vsel %vm48, %v49, %v47
    %v51 = vsub.f32 4.0, %v50
    %v52 = vmax.f32 %v51, 0.0
    %v53 = vsub.f32 1.0, %v31
    %v54 = vmul.f32 %v53, %v38
    %v55 = vmul.f32 %v52, %v52
    %v56 = vmul.f32 %v31, %v55
    %v57 = vadd.f32 %v54, %v56
    %vm58 = vcmask 7168
    %v59 = vsel %vm58, %v57, 0.0
    %60 = vadd.xlane.f32.xlu0 %v59
    %v61 = vpop.xlane.xlu0 %60
    %v62 = vrot.slane %v61, 4
    %v63 = vadd.f32 %v61, %v62
    %v64 = vrot.slane %v63, 2
    %v65 = vadd.f32 %v63, %v64
    %v66 = vrot.slane %v65, 1
    %v67 = vadd.f32 %v65, %v66
    %s68 = vtos %v67
    %v69 = vstv %s68
    %v70 = vrcp.pop 8.0
    %v71 = vmul.f32 8.0, %v70
    %v72 = vsub.f32 1.0, %v71
    %v73 = vmul.f32 %v70, %v72
    %v74 = vadd.f32 %v70, %v73
    %vm75 = vweird.f32 %v70
    %v76 = vsel %vm75, %v70, %v74
    %v77 = vmul.f32 %v69, %v76
    %vm78 = vcmask 0
    %79 = vst.msk [vmem:[#allocation5] sm:$0x1] %vm78, %v77
    // Predicated region
    $region18: #{tpu_custom_call.1} parent=1 // pred_check
      _
    $region19: #{tpu_custom_call.1} parent=1 // pred_check_branch
      %81 = sbr.rel (0) target = $region21
    $region20: #{tpu_custom_call.1} parent=1 // pred_region
      %83 = vsyncadd [#allocation4], 0
      %s85 = sshll.u32 [#allocation5], 4
      %s86 = int_to_ptr.vmem [resolvable:$true] %s85
      %s87 = sshll.u32 %s3, 4
      %s88 = int_to_ptr.hbm [resolvable:$true] %s87
      %90 = dma.vmem_to_hbm [thread:$0]  %s86, 16, %s88, [#allocation4]
    $region21: #{tpu_custom_call.1} parent=1 // pred_fallthru
      _
    // Predicated region
    $region22: #{tpu_custom_call.1} parent=1 // pred_check
      _
    $region23: #{tpu_custom_call.1} parent=1 // pred_check_branch
      %92 = sbr.rel (0) target = $region25
    $region24: #{tpu_custom_call.1} parent=1 // pred_region
      %94 = dma.done [#allocation4], 16
    $region25: #{tpu_custom_call.1} parent=1 // pred_fallthru
      _
    %95 = vsyncpa [#allocation3], 1
    %96 = vsyncpa [#allocation4], 1

</llo_original>
